<compile_context>
chip_gen: v6e
topology: v6e:2x2x1
jax: 0.10.0
libtpu: 0.0.40
codegen_flags: <defaults>
</compile_context>

<pallas_src>
import functools

import jax
import jax.numpy as jnp
from jax import lax
from jax.experimental import pallas as pl
from jax.experimental.pallas import tpu as pltpu


def _round_up(x: int, m: int) -> int:
    return (x + m - 1) // m * m


def make_dnn_kernel(dropout_p: float, train: bool):
    """Fused MLP: y^T = W2 @ dropout(relu(x @ W1 + b1))^T + b2 (batch on lanes)."""
    apply_dropout = train and dropout_p > 0.0
    if apply_dropout:
        # Drop an element iff bits < dropout_p * 2^32.  (Clamped: dropout_p ~= 1.0
        # keeps each element with prob 2^-32 instead of exactly 0 -- negligible.)
        drop_thresh = min(int(round(dropout_p * 4294967296.0)), 4294967295)

    def kernel(seed_ref, x_ref, w1_ref, b1_ref, w2_ref, b2_ref, o_ref):
        # ---- fc1: cast the x tile f32->bf16 in-kernel (one VPU cast, hidden
        #      under the MXU); f32 accumulation, bias + ReLU stay in f32.
        xb = x_ref[...].astype(w1_ref.dtype)
        h = jnp.dot(xb, w1_ref[...], preferred_element_type=jnp.float32)
        h = jnp.maximum(h + b1_ref[...], 0.0)

        # ---- Dropout (training only); 1/(1-p) is folded into W2 at prep time.
        if apply_dropout:
            # Decorrelate across training steps AND batch tiles.
            pltpu.prng_seed(seed_ref[0] * pl.num_programs(0) + pl.program_id(0))
            bits = pltpu.prng_random_bits(h.shape)
            if bits.dtype != jnp.uint32:            # trace-time safety only
                bits = pltpu.bitcast(bits, jnp.uint32)
            h = jnp.where(bits >= jnp.uint32(drop_thresh), h, 0.0)

        # ---- fc2, transposed output: y^T[n, b] = sum_d W2[n, d] * h[b, d].
        # Output tile is (8, TB) with batch on the lane axis, so the HBM
        # writeback is 8 sublanes of f32 instead of 128 lanes (5 real columns).
        yT = lax.dot_general(w2_ref[...], h.astype(w2_ref.dtype),
                             dimension_numbers=(((1,), (1,)), ((), ())),
                             preferred_element_type=jnp.float32)
        o_ref[...] = (yT + b2_ref[...]).astype(o_ref.dtype)

    return kernel


def prepare_params(w1_t, b1, w2_t, b2, *, dropout_p=0.5, train=False,
                   matmul_dtype=jnp.bfloat16):
    """One-time parameter prep (NOT per forward call).

    Pads to lane-dense shapes, casts to the MXU dtype, stores W2 in
    (out, in) layout for the transposed-output matmul, and folds the
    inverted-dropout 1/(1-p) scale into W2 when training.

      w1_t: (seq_len, d_model)   b1: (1, d_model) or (d_model,)
      w2_t: (d_model, n_out)     b2: (1, n_out)  or (n_out,)
    """
    seq_len, d_model = w1_t.shape
    n_out = w2_t.shape[1]
    D_PAD = _round_up(d_model, 128)              # lane-dense hidden width
    N_PAD = _round_up(max(n_out, 8), 8)          # sublane-padded output rows

    w1p = jnp.zeros((seq_len, D_PAD), matmul_dtype).at[:, :d_model].set(
        w1_t.astype(matmul_dtype))
    b1p = jnp.zeros((1, D_PAD), jnp.float32).at[:, :d_model].set(
        jnp.reshape(b1, (1, d_model)).astype(jnp.float32))

    w2 = jnp.reshape(w2_t, (d_model, n_out)).T   # (n_out, d_model) = (out, in)
    if train and dropout_p > 0.0:
        w2 = w2 * (1.0 / (1.0 - dropout_p))      # fold inverted-dropout scale
    w2p = jnp.zeros((N_PAD, D_PAD), matmul_dtype).at[:n_out, :d_model].set(
        w2.astype(matmul_dtype))
    b2p = jnp.zeros((N_PAD, 1), jnp.float32).at[:n_out, :].set(
        jnp.reshape(b2, (n_out, 1)).astype(jnp.float32))
    return w1p, b1p, w2p, b2p


def _choose_tile_batch(B: int, tile_batch: int) -> int:
    """Batch tile: B<=128 -> one full-dim tile; else a multiple of 128 (so the
    transposed output block stays lane-dense), capped at 256 for vreg pressure,
    and small enough that v7x's two TensorCores each get >= 1 grid tile."""
    if B <= 128:
        return B
    tb = max(128, (min(tile_batch, 256) // 128) * 128)
    if pl.cdiv(B, tb) < 2:
        tb = 128
    return tb


def dnn_forward(seed, x, w1p, b1p, w2p, b2p, *, n_out, dropout_p=0.5,
                train=False, tile_batch=256):
    """x: (B, seq_len) in its native dtype (no wrapper-side pad/cast pass).
    w1p/b1p/w2p/b2p: outputs of prepare_params (prepared once, reused)."""
    B, seq_len = x.shape
    D_PAD = w1p.shape[1]
    N_PAD = w2p.shape[0]

    TB = _choose_tile_batch(B, tile_batch)
    grid_b = pl.cdiv(B, TB)

    kernel = make_dnn_kernel(dropout_p, train)

    # Advisory cost estimate: padded dims are what the kernel actually
    # reads/multiplies, so these numbers reflect true kernel work.
    wbytes = jnp.dtype(w1p.dtype).itemsize
    flops = 2 * grid_b * TB * (seq_len * D_PAD + D_PAD * N_PAD)
    bytes_accessed = (B * seq_len * x.dtype.itemsize          # x (read once)
                      + seq_len * D_PAD * wbytes + D_PAD * 4  # W1, b1
                      + N_PAD * D_PAD * wbytes + N_PAD * 4    # W2, b2
                      + N_PAD * B * 4)                        # transposed out

    out_t = pl.pallas_call(
        kernel,
        out_shape=jax.ShapeDtypeStruct((N_PAD, B), jnp.float32),
        grid_spec=pltpu.PrefetchScalarGridSpec(
            num_scalar_prefetch=1,              # dropout seed lives in SMEM
            grid=(grid_b,),
            in_specs=[
                # batch-tiled activations; if B % TB != 0 the last tile is
                # clipped by Pallas and any garbage rows are row-local
                # (row-wise matmul) and never written back.
                pl.BlockSpec((TB, seq_len), lambda i, s: (i, 0)),
                # weights/biases resident across the whole grid (tiny here;
                # for large seq_len mark these pl.Buffered(1) or add a K axis
                # instead of raising vmem_limit_bytes).
                pl.BlockSpec((seq_len, D_PAD), lambda i, s: (0, 0)),
                pl.BlockSpec((1, D_PAD), lambda i, s: (0, 0)),
                pl.BlockSpec((N_PAD, D_PAD), lambda i, s: (0, 0)),
                pl.BlockSpec((N_PAD, 1), lambda i, s: (0, 0)),
            ],
            out_specs=pl.BlockSpec((N_PAD, TB), lambda i, s: (0, i)),
        ),
        compiler_params=pltpu.CompilerParams(
            dimension_semantics=("parallel",),
            vmem_limit_bytes=32 * 1024 * 1024,   # safe on v7x's 64 MiB VMEM
        ),
        cost_estimate=pl.CostEstimate(
            flops=flops, transcendentals=0, bytes_accessed=bytes_accessed),
    )(seed, x, w1p, b1p, w2p, b2p)

    # (n_out_pad, B) -> (B, n_out): tiny wrapper-side slice + transpose.
    return out_t[:n_out, :].T


def reference_forward(x, w1_t, b1, w2_t, b2, matmul_dtype=jnp.float32):
    h = jnp.dot(x.astype(matmul_dtype), w1_t.astype(matmul_dtype),
                preferred_element_type=jnp.float32)
    h = jnp.maximum(h + b1, 0.0)
    y = jnp.dot(h.astype(matmul_dtype), w2_t.astype(matmul_dtype),
                preferred_element_type=jnp.float32)
    return y + b2


if __name__ == "__main__":
    # Small shapes implied by the module: config.seq_len -> config.d_model -> 5
    batch, seq_len, d_model, n_out = 8, 8, 32, 5
    dropout = 0.5

    key = jax.random.PRNGKey(0)
    k_x, k_w1, k_b1, k_w2, k_b2 = jax.random.split(key, 5)

    x = jax.random.normal(k_x, (batch, seq_len), dtype=jnp.float32)
    # Math-layout parameters: (in_features, out_features)
    w1_t = jax.random.normal(k_w1, (seq_len, d_model), dtype=jnp.float32) * 0.1
    b1 = jax.random.normal(k_b1, (1, d_model), dtype=jnp.float32) * 0.1
    w2_t = jax.random.normal(k_w2, (d_model, n_out), dtype=jnp.float32) * 0.1
    b2 = jax.random.normal(k_b2, (1, n_out), dtype=jnp.float32) * 0.1

    # One-time parameter prep (padding/casting is NOT done per forward call).
    w1p, b1p, w2p, b2p = prepare_params(w1_t, b1, w2_t, b2,
                                        dropout_p=dropout, train=False)
    seed = jnp.array([0], dtype=jnp.int32)

    # ---- Eval path (dropout = identity), compared against references -------
    run_eval = jax.jit(functools.partial(
        dnn_forward, n_out=n_out, dropout_p=dropout, train=False))
    out = jax.block_until_ready(run_eval(seed, x, w1p, b1p, w2p, b2p))
    assert out.shape == (batch, n_out), out.shape

    ref_bf16 = reference_forward(x, w1_t, b1, w2_t, b2,
                                 matmul_dtype=jnp.bfloat16)
    assert jnp.allclose(out, ref_bf16, atol=1e-4, rtol=1e-4), \
        "mismatch vs bf16-matmul reference"

    ref_f32 = reference_forward(x, w1_t, b1, w2_t, b2)
    assert jnp.allclose(out, ref_f32, atol=3e-2, rtol=3e-2), \
        "mismatch vs f32 reference beyond bf16 tolerance"

    # TODO(synk): training-mode dropout (pltpu.prng_seed / prng_random_bits,
    # integer-threshold mask, 1/(1-p) folded into W2 by prepare_params) is
    # implemented but not exercised here: the TPU hardware-PRNG primitives have
    # no CPU/interpret lowering and its stream is not bit-identical to
    # torch.nn.Dropout's RNG (same distribution).

    print("KERNEL_OK")
</pallas_src>

<mosaic_0001>
module attributes {stable_mosaic.version = 11 : i64} {
  func.func @kernel(%arg0: i32, %arg1: memref<1xi32, #tpu.memory_space<smem>>, %arg2: memref<8x8xf32, #tpu.memory_space<vmem>>, %arg3: memref<8x128xbf16, #tpu.memory_space<vmem>>, %arg4: memref<1x128xf32, #tpu.memory_space<vmem>>, %arg5: memref<8x128xbf16, #tpu.memory_space<vmem>>, %arg6: memref<8x1xf32, #tpu.memory_space<vmem>>, %arg7: memref<8x8xf32, #tpu.memory_space<vmem>>) attributes {dimension_semantics = [#tpu.dimension_semantics<parallel>], iteration_bounds = array<i64: 1>, scalar_prefetch = 1 : i64, scratch_operands = 0 : i64, tpu.core_type = #tpu.core_type<tc>, window_params = [{transform_indices = @transform_0, window_bounds = array<i64: 8, 8>}, {pipeline_mode = #tpu.pipeline_mode<synchronous>, transform_indices = @transform_1, window_bounds = array<i64: 8, 128>}, {pipeline_mode = #tpu.pipeline_mode<synchronous>, transform_indices = @transform_2, window_bounds = array<i64: 1, 128>}, {pipeline_mode = #tpu.pipeline_mode<synchronous>, transform_indices = @transform_3, window_bounds = array<i64: 8, 128>}, {pipeline_mode = #tpu.pipeline_mode<synchronous>, transform_indices = @transform_4, window_bounds = array<i64: 8, 1>}, {transform_indices = @transform_5, window_bounds = array<i64: 8, 8>}]} {
    %c0 = arith.constant 0 : index
    %c0_0 = arith.constant 0 : index
    %0 = vector.load %arg2[%c0, %c0_0] : memref<8x8xf32, #tpu.memory_space<vmem>>, vector<8x8xf32>
    %1 = arith.truncf %0 : vector<8x8xf32> to vector<8x8xbf16>
    %c0_1 = arith.constant 0 : index
    %c0_2 = arith.constant 0 : index
    %2 = vector.load %arg3[%c0_1, %c0_2] : memref<8x128xbf16, #tpu.memory_space<vmem>>, vector<8x128xbf16>
    %cst = arith.constant dense<0.000000e+00> : vector<8x128xf32>
    %3 = tpu.matmul %1, %2, %cst {dimension_numbers = #tpu.dot_dimension_numbers<[1], [0], [0], [1], [0, 0, 1, 1], [], []>} : vector<8x8xbf16>, vector<8x128xbf16>, vector<8x128xf32> -> vector<8x128xf32>
    %c0_3 = arith.constant 0 : index
    %c0_4 = arith.constant 0 : index
    %4 = vector.load %arg4[%c0_3, %c0_4] : memref<1x128xf32, #tpu.memory_space<vmem>>, vector<1x128xf32>
    %5 = vector.broadcast %4 : vector<1x128xf32> to vector<8x128xf32>
    %6 = arith.addf %3, %5 : vector<8x128xf32>
    %cst_5 = arith.constant 0.000000e+00 : f32
    %7 = vector.broadcast %cst_5 : f32 to vector<8x128xf32>
    %8 = arith.maximumf %6, %7 : vector<8x128xf32>
    %c0_6 = arith.constant 0 : index
    %c0_7 = arith.constant 0 : index
    %9 = vector.load %arg5[%c0_6, %c0_7] : memref<8x128xbf16, #tpu.memory_space<vmem>>, vector<8x128xbf16>
    %10 = arith.truncf %8 : vector<8x128xf32> to vector<8x128xbf16>
    %cst_8 = arith.constant dense<0.000000e+00> : vector<8x8xf32>
    %11 = tpu.matmul %9, %10, %cst_8 {dimension_numbers = #tpu.dot_dimension_numbers<[1], [1], [0], [0], [0, 0, 1, 0], [], []>} : vector<8x128xbf16>, vector<8x128xbf16>, vector<8x8xf32> -> vector<8x8xf32>
    %c0_9 = arith.constant 0 : index
    %c0_10 = arith.constant 0 : index
    %12 = vector.load %arg6[%c0_9, %c0_10] : memref<8x1xf32, #tpu.memory_space<vmem>>, vector<8x1xf32>
    %13 = vector.broadcast %12 : vector<8x1xf32> to vector<8x8xf32>
    %14 = arith.addf %11, %13 : vector<8x8xf32>
    %c0_11 = arith.constant 0 : index
    %c0_12 = arith.constant 0 : index
    %15 = vector.load %arg7[%c0_11, %c0_12] : memref<8x8xf32, #tpu.memory_space<vmem>>, vector<8x8xf32>
    tpu.vector_store %arg7[%c0_11, %c0_12], %14 {strides = array<i32>} : memref<8x8xf32, #tpu.memory_space<vmem>>, vector<8x8xf32>,
    return
  }
  func.func @transform_0(%arg0: i32, %arg1: memref<1xi32, #tpu.memory_space<smem>>) -> (i32, i32) {
    %c0_i32 = arith.constant 0 : i32
    %c0_i32_0 = arith.constant 0 : i32
    return %arg0, %c0_i32 : i32, i32
  }
  func.func @transform_1(%arg0: i32, %arg1: memref<1xi32, #tpu.memory_space<smem>>) -> (i32, i32) {
    %c0_i32 = arith.constant 0 : i32
    %c0_i32_0 = arith.constant 0 : i32
    %c0_i32_1 = arith.constant 0 : i32
    return %c0_i32, %c0_i32_0 : i32, i32
  }
  func.func @transform_2(%arg0: i32, %arg1: memref<1xi32, #tpu.memory_space<smem>>) -> (i32, i32) {
    %c0_i32 = arith.constant 0 : i32
    %c0_i32_0 = arith.constant 0 : i32
    %c0_i32_1 = arith.constant 0 : i32
    return %c0_i32, %c0_i32_0 : i32, i32
  }
  func.func @transform_3(%arg0: i32, %arg1: memref<1xi32, #tpu.memory_space<smem>>) -> (i32, i32) {
    %c0_i32 = arith.constant 0 : i32
    %c0_i32_0 = arith.constant 0 : i32
    %c0_i32_1 = arith.constant 0 : i32
    return %c0_i32, %c0_i32_0 : i32, i32
  }
  func.func @transform_4(%arg0: i32, %arg1: memref<1xi32, #tpu.memory_space<smem>>) -> (i32, i32) {
    %c0_i32 = arith.constant 0 : i32
    %c0_i32_0 = arith.constant 0 : i32
    %c0_i32_1 = arith.constant 0 : i32
    return %c0_i32, %c0_i32_0 : i32, i32
  }
  func.func @transform_5(%arg0: i32, %arg1: memref<1xi32, #tpu.memory_space<smem>>) -> (i32, i32) {
    %c0_i32 = arith.constant 0 : i32
    %c0_i32_0 = arith.constant 0 : i32
    return %c0_i32, %arg0 : i32, i32
  }
}

</mosaic_0001>

<llo_original>
// kernel: dnn_forward.1
$region0: #{dnn_forward.1}
  #allocation0 [shape = 'u32[]', space=smem, size = 0x4, offset = 0x4, fixed_abs, tag = 'smem constant byte address 0x4 - core index']
  #allocation1 [shape = 'u32[144,128]{1,0:T(1,128)}', space=vmem, size = 0x12000, scoped, tag = 'internal scratch']
  #allocation2 [shape = 's32[1]{0}', space=sflag, size = 0x4, scoped, tag = 'scoped memory for dnn_forward.1']
  #allocation3 [shape = 's32[1]{0:T(128)S(6)}', space=smem, size = 0x200, scoped, tag = 'prefetched SMEM operand 0']
  %s0 = inlined_call_operand.<no memory space> [shape: s32[1], index: 0, kind: input, shape index: {}]
  %s1 = inlined_call_operand.vmem [shape: f32[8,8], index: 1, kind: input, shape index: {}]
  %s2 = inlined_call_operand.vmem [shape: bf16[8,128], index: 2, kind: input, shape index: {}]
  %s3 = inlined_call_operand.hbm [shape: f32[1,128], index: 3, kind: input, shape index: {}]
  %s4 = inlined_call_operand.vmem [shape: bf16[8,128], index: 4, kind: input, shape index: {}]
  %s5 = inlined_call_operand.vmem [shape: f32[8,1], index: 5, kind: input, shape index: {}]
  %s6 = inlined_call_operand.vmem [shape: f32[8,8], index: 6, kind: output, shape index: {}]
  %s7 = sld [smem:[#allocation0]]
  $region34: #{dnn_forward.1} parent=0
    _
  %s9 = ssub.s32 1, %s7
  %s10 = scalar_select 0, %s9, %s7
  %11 = sst [smem:[#allocation3]] %s0
  $region1: #{dnn_forward.1} parent=0
    #allocation4 [shape = 'u8[512]{0}', space=vmem, size = 0x400, scoped, tag = 'input window, operand 3, single buffered']
    #allocation5 [shape = 's32[1]{0}', space=sflag, size = 0x4, scoped, tag = 'scoped memory for dnn_forward.1']
    %12 = vsyncpa [#allocation5], 0
    // Predicated region
    $region2: #{dnn_forward.1} parent=1 // pred_check
      _
    $region3: #{dnn_forward.1} parent=1 // pred_check_branch
      %14 = sbr.rel (0) target = $region5
    $region4: #{dnn_forward.1} parent=1 // pred_region
      _
    $region5: #{dnn_forward.1} parent=1 // pred_fallthru
      _
    // Predicated region
    $region6: #{dnn_forward.1} parent=1 // pred_check
      _
    $region7: #{dnn_forward.1} parent=1 // pred_check_branch
      %16 = sbr.rel (0) target = $region9
    $region8: #{dnn_forward.1} parent=1 // pred_region
      _
    $region9: #{dnn_forward.1} parent=1 // pred_fallthru
      _
    // Predicated region
    $region10: #{dnn_forward.1} parent=1 // pred_check
      _
    $region11: #{dnn_forward.1} parent=1 // pred_check_branch
      %18 = sbr.rel (0) target = $region13
    $region12: #{dnn_forward.1} parent=1 // pred_region
      %s20 = ssub.s32 16, 16
      %21 = vsyncadd [#allocation5], %s20
      %s23 = sshll.u32 [#allocation4], 4
      %s24 = int_to_ptr.vmem [resolvable:$true] %s23
      %26 = dma.hbm_to_vmem [thread:$0]  %s3, 16, %s24, [#allocation5]
    $region13: #{dnn_forward.1} parent=1 // pred_fallthru
      _
    // Predicated region
    $region14: #{dnn_forward.1} parent=1 // pred_check
      _
    $region15: #{dnn_forward.1} parent=1 // pred_check_branch
      %28 = sbr.rel (0) target = $region17
    $region16: #{dnn_forward.1} parent=1 // pred_region
      _
    $region17: #{dnn_forward.1} parent=1 // pred_fallthru
      _
    // Predicated region
    $region18: #{dnn_forward.1} parent=1 // pred_check
      _
    $region19: #{dnn_forward.1} parent=1 // pred_check_branch
      %30 = sbr.rel (0) target = $region21
    $region20: #{dnn_forward.1} parent=1 // pred_region
      _
    $region21: #{dnn_forward.1} parent=1 // pred_fallthru
      _
    // Predicated region
    $region22: #{dnn_forward.1} parent=1 // pred_check
      _
    $region23: #{dnn_forward.1} parent=1 // pred_check_branch
      %32 = sbr.rel (0) target = $region25
    $region24: #{dnn_forward.1} parent=1 // pred_region
      %33 = dma.done [#allocation5], 16
    $region25: #{dnn_forward.1} parent=1 // pred_fallthru
      _
    %v35 = vld [vmem:[%s1] sm:$0xff]
    %v36 = vpack.c.bf16 %v35, %v35
    %v37 = vld [vmem:[%s2] sm:$0xf]
    %v38 = vld [vmem:[#allocation4] sm:$0x1]
    %v40 = vlaneseq
    %v41 = vshrl.u32 %v40, 7
    %v42 = vsub.s32 0, %v41
    %v43 = vrot.slane %v38, %v42
    %vm45 = vcmask 64512
    %v47 = vsel %vm45, %v36, 0
    %vm49 = vcmask 1043456
    %v51 = vsel %vm49, %v37, 0
    %53 = vmatprep.subr.bf16.mxu0 0
    %54 = vmatpush1.bf16.msra.mxu0 0
    %55 = vmatprep.subr.bf16.mxu0 0
    %56 = vmatpush1.bf16.msra.mxu0 0
    %57 = vmatprep.subr.bf16.mxu0 0
    %58 = vmatpush1.bf16.msra.mxu0 0
    %59 = vmatprep.subr.bf16.mxu0 0
    %60 = vmatpush1.bf16.msra.mxu0 0
    %61 = vmatprep.subr.bf16.mxu0 0
    %62 = vmatpush1.bf16.msra.mxu0 0
    %63 = vmatprep.subr.bf16.mxu0 0
    %64 = vmatpush1.bf16.msra.mxu0 0
    %65 = vmatprep.subr.bf16.mxu0 0
    %66 = vmatpush1.bf16.msra.mxu0 0
    %67 = vmatprep.subr.bf16.mxu0 0
    %68 = vmatpush1.bf16.msra.mxu0 %v51
    %69 = vmatprep.subr.bf16.mxu0 0
    %70 = vmatpush2.bf16.msra.mxu0 0
    %71 = vmatprep.subr.bf16.mxu0 0
    %72 = vmatpush2.bf16.msra.mxu0 0
    %73 = vmatprep.subr.bf16.mxu0 0
    %74 = vmatpush2.bf16.msra.mxu0 0
    %75 = vmatprep.subr.bf16.mxu0 0
    %76 = vmatpush2.bf16.msra.mxu0 0
    %77 = vmatprep.subr.bf16.mxu0 0
    %78 = vmatpush2.bf16.msra.mxu0 0
    %79 = vmatprep.subr.bf16.mxu0 0
    %80 = vmatpush2.bf16.msra.mxu0 0
    %81 = vmatprep.subr.bf16.mxu0 0
    %82 = vmatpush2.bf16.msra.mxu0 0
    %83 = vmatprep.subr.bf16.mxu0 0
    %84 = vmatpush2.bf16.msra.mxu0 0
    %85 = vmatprep.mubr.bf16.mxu0 0
    %86 = vmatmul.mubr.bf16.gmra.mxu0 %v47
    %v87 = vpop.f32.mrf.mxu0
    %v88 = vadd.f32 %v43, %v87
    %v89 = vpop.f32.mrf.mxu0
    %v90 = vpop.f32.mrf.mxu0
    %v91 = vpop.f32.mrf.mxu0
    %92 = vdwg.mxu0
    %v93 = vmax.f32 %v88, 0.0
    %v94 = vld [vmem:[%s4] sm:$0xf]
    %v95 = vpack.c.bf16 %v93, %v93
    %v96 = vld [vmem:[%s5] sm:$0xff]
    %98 = vset.pattern.permute.xlu0 0
    %99 = vperm.xlu0 %98, %v96
    %v100 = vpop.permute.xlu0 %99
    %102 = vmatprep.subr.bf16.mxu0 0
    %103 = vmatpush1.bf16.xpose.msra.mxu0 0
    %104 = vmatprep.subr.bf16.mxu0 0
    %105 = vmatpush1.bf16.xpose.msra.mxu0 0
    %106 = vmatprep.subr.bf16.mxu0 0
    %107 = vmatpush1.bf16.xpose.msra.mxu0 0
    %108 = vmatprep.subr.bf16.mxu0 0
    %109 = vmatpush1.bf16.xpose.msra.mxu0 0
    %110 = vmatprep.subr.bf16.mxu0 0
    %111 = vmatpush1.bf16.xpose.msra.mxu0 0
    %112 = vmatprep.subr.bf16.mxu0 0
    %113 = vmatpush1.bf16.xpose.msra.mxu0 0
    %114 = vmatprep.subr.bf16.mxu0 0
    %115 = vmatpush1.bf16.xpose.msra.mxu0 0
    %116 = vmatprep.subr.bf16.mxu0 0
    %117 = vmatpush1.bf16.xpose.msra.mxu0 %v95
    %118 = vmatprep.subr.bf16.mxu0 0
    %119 = vmatpush2.bf16.xpose.msra.mxu0 0
    %120 = vmatprep.subr.bf16.mxu0 0
    %121 = vmatpush2.bf16.xpose.msra.mxu0 0
    %122 = vmatprep.subr.bf16.mxu0 0
    %123 = vmatpush2.bf16.xpose.msra.mxu0 0
    %124 = vmatprep.subr.bf16.mxu0 0
    %125 = vmatpush2.bf16.xpose.msra.mxu0 0
    %126 = vmatprep.subr.bf16.mxu0 0
    %127 = vmatpush2.bf16.xpose.msra.mxu0 0
    %128 = vmatprep.subr.bf16.mxu0 0
    %129 = vmatpush2.bf16.xpose.msra.mxu0 0
    %130 = vmatprep.subr.bf16.mxu0 0
    %131 = vmatpush2.bf16.xpose.msra.mxu0 0
    %132 = vmatprep.subr.bf16.mxu0 0
    %133 = vmatpush2.bf16.xpose.msra.mxu0 0
    %134 = vmatprep.mubr.bf16.mxu0 0
    %135 = vmatmul.mubr.bf16.gmra.mxu0 %v94
    %v136 = vpop.f32.mrf.mxu0
    %v137 = vadd.f32 %v100, %v136
    %v138 = vpop.f32.mrf.mxu0
    %v139 = vpop.f32.mrf.mxu0
    %v140 = vpop.f32.mrf.mxu0
    %141 = vdwg.mxu0
    %142 = vst.msk [vmem:[%s6] sm:$0xff] %vm45, %v137
    // Predicated region
    $region26: #{dnn_forward.1} parent=1 // pred_check
      _
    $region27: #{dnn_forward.1} parent=1 // pred_check_branch
      %144 = sbr.rel (0) target = $region29
    $region28: #{dnn_forward.1} parent=1 // pred_region
      _
    $region29: #{dnn_forward.1} parent=1 // pred_fallthru
      _
    // Predicated region
    $region30: #{dnn_forward.1} parent=1 // pred_check
      _
    $region31: #{dnn_forward.1} parent=1 // pred_check_branch
      %146 = sbr.rel (0) target = $region33
    $region32: #{dnn_forward.1} parent=1 // pred_region
      _
    $region33: #{dnn_forward.1} parent=1 // pred_fallthru
      _
    %147 = vsyncpa [#allocation5], 1

</llo_original>
